<compile_context>
chip_gen: v7x
topology: tpu7x:2x2x1
jax: 0.10.0
libtpu: 0.0.40
codegen_flags: <defaults>
</compile_context>

<pallas_src>
import math

import jax
import jax.numpy as jnp
from jax.experimental import pallas as pl
from jax.experimental.pallas import tpu as pltpu


_ONEHOT_MAX_VOCAB = 2048       # one-hot MXU gather only for small vocabularies
_OUT_BLOCK_MAX_BYTES = 4 << 20  # cap on the per-step output block size
_VMEM_HEADROOM = 12 << 20       # compiler scratch / temporaries / slack


def _vmem_capacity_bytes() -> int:
    """Per-TensorCore VMEM capacity (generation aware), with a safe fallback."""
    try:
        cap = getattr(pltpu.get_tpu_info(), "vmem_capacity_bytes", None)
        if cap:
            return int(cap)
    except Exception:
        pass
    return 64 << 20  # conservative: v7x per-TensorCore VMEM


# --------------------------------------------------------------------------
# Kernels
# --------------------------------------------------------------------------
def _resident_onehot_kernel(idx_ref, w_ref, o_ref):
    """Table resident in VMEM; gather a chunk of rows with one MXU matmul.

    idx_ref: (chunk, 1) int32 VMEM block of row indices for this grid step.
    w_ref:   (num_embeddings, d_pad) VMEM-resident table (constant block idx).
    o_ref:   (chunk, d_pad) output block (lane/sublane dense, unmasked store).
    """
    chunk = o_ref.shape[0]
    vocab = w_ref.shape[0]
    cols = jax.lax.broadcasted_iota(jnp.int32, (chunk, vocab), 1)
    one_hot = (idx_ref[...] == cols).astype(w_ref.dtype)
    o_ref[...] = jnp.dot(
        one_hot, w_ref[...], preferred_element_type=jnp.float32
    ).astype(o_ref.dtype)


def _resident_rowcopy_kernel(idx_ref, w_ref, o_ref):
    """Table resident in VMEM; copy rows packed 8 at a time (dense stores).

    idx_ref: (n_pad,) int32 indices in SMEM (scalar prefetch).
    w_ref:   (num_embeddings, d_pad) VMEM-resident table.
    o_ref:   (chunk, d_pad) output block.
    """
    chunk = o_ref.shape[0]
    n_groups = chunk // 8
    base = pl.program_id(0) * chunk

    def group(g, carry):
        off = pl.multiple_of(g * 8, 8)
        # 8 dynamic single-row loads, concatenated (XLU) into one (8, d_pad)
        # value -> a single unmasked sublane-dense store.
        rows = [w_ref[pl.ds(idx_ref[base + off + r], 1), :] for r in range(8)]
        o_ref[pl.ds(off, 8), :] = jnp.concatenate(rows, axis=0)
        return carry

    # Bounded unroll keeps code size / compile time in check for chunk >= 256
    # while giving the scheduler a visible loop.
    jax.lax.fori_loop(0, n_groups, group, 0, unroll=math.gcd(8, n_groups))


def _dma_gather_kernel(idx_ref, w_hbm_ref, o_ref, sem):
    """Table stays in HBM; one row DMA per gathered row, all in flight at once.

    All `chunk` row DMAs share one DMA semaphore and land directly in the
    (chunk, d_pad) output block, which the Pallas pipeline double-buffers so
    this chunk's gather overlaps the previous chunk's HBM writeback.
    """
    chunk = o_ref.shape[0]
    base = pl.program_id(0) * chunk
    copies = []
    for j in range(chunk):
        row = idx_ref[base + j]
        cp = pltpu.make_async_copy(
            w_hbm_ref.at[pl.ds(row, 1), :],
            o_ref.at[pl.ds(j, 1), :],
            sem.at[0],
        )
        cp.start()
        copies.append(cp)
    # All copies are identically sized; each wait consumes exactly one copy's
    # worth of signal on the shared semaphore.
    for cp in copies:
        cp.wait()


# --------------------------------------------------------------------------
# Wrapper
# --------------------------------------------------------------------------
def cpu_embedding_forward(x, weight, *, chunk_rows=512, gather_mode="auto"):
    """x: (batch, num_fields) integer array; weight: (num_embeddings, embed_dim).

    Returns (batch, num_fields, embed_dim) with out[b, f] = weight[x[b, f]].

    chunk_rows: rows gathered per grid step (rounded to a multiple of 8 and
        capped so the output block stays <= ~4 MiB).
    gather_mode: "auto" | "onehot" | "rowcopy" | "dma" (forcing is for tests).

    Note: out-of-range indices are clamped (PyTorch raises); padded positions
    gather row 0 and are discarded.
    """
    batch, num_fields = x.shape
    num_embeddings, embed_dim = weight.shape
    n = batch * num_fields
    itemsize = jnp.dtype(weight.dtype).itemsize

    # Lane-dense output: pad the embedding dim up to a multiple of 128 so
    # every store / writeback DMA is unmasked.
    d_pad = max(128, -(-embed_dim // 128) * 128)
    if d_pad != embed_dim:
        weight = jnp.pad(weight, ((0, 0), (0, d_pad - embed_dim)))

    # Clamp indices -> no out-of-bounds loads / DMA source offsets.
    flat_idx = jnp.clip(x.reshape(n).astype(jnp.int32), 0, num_embeddings - 1)

    # Chunk size: multiple of 8, large enough to amortize per-step overhead,
    # small enough that the (double-buffered) output block stays modest.
    n8 = -(-n // 8) * 8
    max_chunk_by_bytes = max(8, (_OUT_BLOCK_MAX_BYTES // (d_pad * itemsize)) // 8 * 8)
    chunk = max(8, (min(chunk_rows, n8, max_chunk_by_bytes) // 8) * 8)
    n_pad = -(-n // chunk) * chunk
    if n_pad > n:
        flat_idx = jnp.pad(flat_idx, (0, n_pad - n))  # padded entries gather row 0
    num_chunks = n_pad // chunk

    table_bytes = num_embeddings * d_pad * itemsize
    out_block_bytes = chunk * d_pad * itemsize

    # Per-TensorCore budgeting: under "parallel" semantics each v7x core holds
    # its own copy of the resident table in its own 64 MiB VMEM.
    vmem_capacity = _vmem_capacity_bytes()
    resident_budget = vmem_capacity - 2 * out_block_bytes - _VMEM_HEADROOM

    if gather_mode == "auto":
        if table_bytes <= resident_budget:
            mode = "onehot" if num_embeddings <= _ONEHOT_MAX_VOCAB else "rowcopy"
        else:
            mode = "dma"
    else:
        mode = gather_mode
    # Single-buffer the resident table only when a double-buffered copy would
    # not fit (keeps the common/small-table path on the default pipeline).
    single_buffer = mode in ("onehot", "rowcopy") and (
        2 * table_bytes > resident_budget
    )

    # VMEM accounting for the scoped limit.
    if mode in ("onehot", "rowcopy"):
        table_bufs = 1 if single_buffer else 2
        needed = table_bufs * table_bytes + 2 * out_block_bytes
        if mode == "onehot":
            needed += 2 * chunk * 128 * 4                    # (chunk,1) idx blocks (lane padded)
            needed += chunk * num_embeddings * 4             # one-hot temporary
            needed += chunk * d_pad * 4                      # f32 matmul result
    else:
        needed = 2 * out_block_bytes
    vmem_limit = int(min(max(needed + _VMEM_HEADROOM, 32 << 20), vmem_capacity))

    # Resident-table BlockSpec: constant block index -> fetched from HBM once
    # per TensorCore and kept resident across all grid steps.
    def _resident_w_spec(index_map):
        if single_buffer:
            return pl.BlockSpec(
                (num_embeddings, d_pad), index_map, pipeline_mode=pl.Buffered(1)
            )
        return pl.BlockSpec((num_embeddings, d_pad), index_map)

    if mode == "onehot":
        kernel = _resident_onehot_kernel
        grid_spec = pltpu.PrefetchScalarGridSpec(
            num_scalar_prefetch=0,
            grid=(num_chunks,),
            in_specs=[
                pl.BlockSpec((chunk, 1), lambda i: (i, 0)),
                _resident_w_spec(lambda i: (0, 0)),
            ],
            out_specs=pl.BlockSpec((chunk, d_pad), lambda i: (i, 0)),
        )
        args = (flat_idx.reshape(n_pad, 1), weight)
    elif mode == "rowcopy":
        kernel = _resident_rowcopy_kernel
        grid_spec = pltpu.PrefetchScalarGridSpec(
            num_scalar_prefetch=1,
            grid=(num_chunks,),
            in_specs=[_resident_w_spec(lambda i, idx: (0, 0))],
            out_specs=pl.BlockSpec((chunk, d_pad), lambda i, idx: (i, 0)),
        )
        args = (flat_idx, weight)
    elif mode == "dma":
        kernel = _dma_gather_kernel
        grid_spec = pltpu.PrefetchScalarGridSpec(
            num_scalar_prefetch=1,
            grid=(num_chunks,),
            in_specs=[pl.BlockSpec(memory_space=pl.ANY)],
            out_specs=pl.BlockSpec((chunk, d_pad), lambda i, idx: (i, 0)),
            scratch_shapes=[pltpu.SemaphoreType.DMA((1,))],
        )
        args = (flat_idx, weight)
    else:
        raise ValueError(f"unknown gather_mode: {gather_mode!r}")

    out_flat = pl.pallas_call(
        kernel,
        out_shape=jax.ShapeDtypeStruct((n_pad, d_pad), weight.dtype),
        grid_spec=grid_spec,
        compiler_params=pltpu.CompilerParams(
            # Output chunks are independent -> parallel (shards the index grid
            # across v7x's two TensorCores; neutral on v5e/v6e).
            dimension_semantics=("parallel",),
            vmem_limit_bytes=vmem_limit,
        ),
    )(*args)

    return out_flat[:n, :embed_dim].reshape(batch, num_fields, embed_dim)


def init_cpu_embedding_params(key, num_embeddings, embed_dim):
    # xavier_uniform_: U(-a, a) with a = sqrt(6 / (fan_in + fan_out))
    bound = math.sqrt(6.0 / (num_embeddings + embed_dim))
    return jax.random.uniform(
        key, (num_embeddings, embed_dim), dtype=jnp.float32,
        minval=-bound, maxval=bound,
    )


if __name__ == "__main__":
    key = jax.random.PRNGKey(0)
    k_w, k_x, k_w2, k_x2 = jax.random.split(key, 4)

    # Test 1: lane-dense embed_dim (128), n a multiple of 8.
    batch, num_fields = 2, 8
    num_embeddings, embed_dim = 32, 128
    weight = init_cpu_embedding_params(k_w, num_embeddings, embed_dim)
    x = jax.random.randint(
        k_x, (batch, num_fields), minval=0, maxval=num_embeddings, dtype=jnp.int32
    )
    ref = weight[x]
    for mode in ("auto", "onehot", "rowcopy", "dma"):
        out = jax.block_until_ready(cpu_embedding_forward(x, weight, gather_mode=mode))
        assert out.shape == (batch, num_fields, embed_dim), (mode, out.shape)
        assert out.dtype == weight.dtype, (mode, out.dtype)
        assert jnp.allclose(out, ref), f"{mode}: mismatch vs reference"

    # Test 2: embed_dim not a multiple of 128 and n not a multiple of the chunk
    # (exercises column padding + index padding).
    batch2, num_fields2 = 3, 5
    num_embeddings2, embed_dim2 = 20, 72
    weight2 = init_cpu_embedding_params(k_w2, num_embeddings2, embed_dim2)
    x2 = jax.random.randint(
        k_x2, (batch2, num_fields2), minval=0, maxval=num_embeddings2, dtype=jnp.int32
    )
    ref2 = weight2[x2]
    for mode in ("auto", "rowcopy", "dma"):
        out2 = jax.block_until_ready(
            cpu_embedding_forward(x2, weight2, gather_mode=mode)
        )
        assert out2.shape == (batch2, num_fields2, embed_dim2), (mode, out2.shape)
        assert jnp.allclose(out2, ref2), f"{mode} (padded): mismatch vs reference"

    print("KERNEL_OK")
</pallas_src>

<mosaic_0001>
module attributes {stable_mosaic.version = 11 : i64} {
  func.func @_resident_onehot_kernel(%arg0: i32, %arg1: memref<16x1xi32, #tpu.memory_space<vmem>>, %arg2: memref<32x128xf32, #tpu.memory_space<vmem>>, %arg3: memref<16x128xf32, #tpu.memory_space<vmem>>) attributes {dimension_semantics = [#tpu.dimension_semantics<parallel>], iteration_bounds = array<i64: 1>, scalar_prefetch = 0 : i64, scratch_operands = 0 : i64, tpu.core_type = #tpu.core_type<tc>, window_params = [{transform_indices = @transform_0, window_bounds = array<i64: 16, 1>}, {pipeline_mode = #tpu.pipeline_mode<synchronous>, transform_indices = @transform_1, window_bounds = array<i64: 32, 128>}, {transform_indices = @transform_2, window_bounds = array<i64: 16, 128>}]} {
    %0 = tpu.iota {dimensions = array<i32: 1>} : vector<16x32xi32>
    %c0 = arith.constant 0 : index
    %c0_0 = arith.constant 0 : index
    %1 = vector.load %arg1[%c0, %c0_0] : memref<16x1xi32, #tpu.memory_space<vmem>>, vector<16x1xi32>
    %2 = vector.broadcast %1 : vector<16x1xi32> to vector<16x32xi32>
    %3 = arith.cmpi eq, %2, %0 : vector<16x32xi32>
    %4 = arith.extui %3 : vector<16x32xi1> to vector<16x32xi32>
    %5 = arith.sitofp %4 : vector<16x32xi32> to vector<16x32xf32>
    %c0_1 = arith.constant 0 : index
    %c0_2 = arith.constant 0 : index
    %6 = vector.load %arg2[%c0_1, %c0_2] : memref<32x128xf32, #tpu.memory_space<vmem>>, vector<32x128xf32>
    %cst = arith.constant dense<0.000000e+00> : vector<16x128xf32>
    %7 = tpu.matmul %5, %6, %cst {dimension_numbers = #tpu.dot_dimension_numbers<[1], [0], [0], [1], [0, 0, 1, 1], [], []>} : vector<16x32xf32>, vector<32x128xf32>, vector<16x128xf32> -> vector<16x128xf32>
    %c0_3 = arith.constant 0 : index
    %c0_4 = arith.constant 0 : index
    %8 = vector.load %arg3[%c0_3, %c0_4] : memref<16x128xf32, #tpu.memory_space<vmem>>, vector<16x128xf32>
    tpu.vector_store %arg3[%c0_3, %c0_4], %7 {strides = array<i32>} : memref<16x128xf32, #tpu.memory_space<vmem>>, vector<16x128xf32>,
    return
  }
  func.func @transform_0(%arg0: i32) -> (i32, i32) {
    %c0_i32 = arith.constant 0 : i32
    %c0_i32_0 = arith.constant 0 : i32
    return %arg0, %c0_i32 : i32, i32
  }
  func.func @transform_1(%arg0: i32) -> (i32, i32) {
    %c0_i32 = arith.constant 0 : i32
    %c0_i32_0 = arith.constant 0 : i32
    %c0_i32_1 = arith.constant 0 : i32
    return %c0_i32, %c0_i32_0 : i32, i32
  }
  func.func @transform_2(%arg0: i32) -> (i32, i32) {
    %c0_i32 = arith.constant 0 : i32
    %c0_i32_0 = arith.constant 0 : i32
    return %arg0, %c0_i32 : i32, i32
  }
}

</mosaic_0001>

<llo_original>
// kernel: tpu_custom_call.1
$region0: #{tpu_custom_call.1}
  #allocation0 [shape = 'u32[]', space=smem, size = 0x4, offset = 0x4, fixed_abs, tag = 'smem constant byte address 0x4 - core index']
  #allocation1 [shape = 'u32[144,128]{1,0:T(1,128)}', space=vmem, size = 0x12000, scoped, tag = 'internal scratch']
  %s0 = inlined_call_operand.vmem [shape: s32[16,1], index: 0, kind: input, shape index: {}]
  %s1 = inlined_call_operand.hbm [shape: f32[32,128], index: 1, kind: input, shape index: {}]
  %s2 = inlined_call_operand.hbm [shape: f32[16,128], index: 2, kind: output, shape index: {}]
  %s3 = sld [smem:[#allocation0]]
  $region22: #{tpu_custom_call.1} parent=0
    _
  %s5 = ssub.s32 1, %s3
  %s6 = scalar_select 0, %s5, %s3
  $region1: #{tpu_custom_call.1} parent=0
    #allocation2 [shape = 'u8[16384]{0}', space=vmem, size = 0x4000, scoped, tag = 'input window, operand 1, single buffered']
    #allocation3 [shape = 's32[1]{0}', space=sflag, size = 0x4, scoped, tag = 'scoped memory for tpu_custom_call.1']
    #allocation4 [shape = 's32[1]{0}', space=sflag, size = 0x4, scoped, tag = 'scoped memory for tpu_custom_call.1']
    #allocation5 [shape = 'u8[8192]{0}', space=vmem, size = 0x2000, scoped, tag = 'output window, operand 0, single buffered']
    %7 = vsyncpa [#allocation3], 0
    %8 = vsyncpa [#allocation4], 0
    // Predicated region
    $region2: #{tpu_custom_call.1} parent=1 // pred_check
      _
    $region3: #{tpu_custom_call.1} parent=1 // pred_check_branch
      %10 = sbr.rel (0) target = $region5
    $region4: #{tpu_custom_call.1} parent=1 // pred_region
      _
    $region5: #{tpu_custom_call.1} parent=1 // pred_fallthru
      _
    // Predicated region
    $region6: #{tpu_custom_call.1} parent=1 // pred_check
      _
    $region7: #{tpu_custom_call.1} parent=1 // pred_check_branch
      %12 = sbr.rel (0) target = $region9
    $region8: #{tpu_custom_call.1} parent=1 // pred_region
      %s14 = ssub.s32 512, 512
      %15 = vsyncadd [#allocation3], %s14
      %s16 = sshll.u32 [#allocation2], 4
      %s17 = int_to_ptr.vmem [resolvable:$true] %s16
      %22 = dma.hbm_to_vmem [thread:$0]  %s1, 512, %s17, [#allocation3], 128, 128, 8
    $region9: #{tpu_custom_call.1} parent=1 // pred_fallthru
      _
    // Predicated region
    $region10: #{tpu_custom_call.1} parent=1 // pred_check
      _
    $region11: #{tpu_custom_call.1} parent=1 // pred_check_branch
      %24 = sbr.rel (0) target = $region13
    $region12: #{tpu_custom_call.1} parent=1 // pred_region
      %25 = dma.done [#allocation3], 512
    $region13: #{tpu_custom_call.1} parent=1 // pred_fallthru
      _
    %v26 = vlaneseq
    %v27 = vand.u32 %v26, 127
    %v28 = vld [vmem:[%s0] sm:$0xff]
    %v29 = vld [vmem:[%s0 + $0x8] sm:$0xff]
    %30 = vset.pattern.permute.xlu0 0
    %31 = vperm.xlu0 %30, %v28
    %v32 = vpop.permute.xlu0 %31
    %33 = vset.pattern.permute.xlu0 0
    %34 = vperm.xlu0 %33, %v29
    %v35 = vpop.permute.xlu0 %34
    %vm36 = vcmp.eq.s32.totalorder %v32, %v27
    %vm37 = vcmp.eq.s32.totalorder %v35, %v27
    %v38 = vsel %vm36, 1, 0
    %v39 = vsel %vm37, 1, 0
    %v40 = vcvt.s32.f32 %v38
    %v41 = vcvt.s32.f32 %v39
    %v42 = vld [vmem:[#allocation2] sm:$0xff]
    %v43 = vld [vmem:[#allocation2 + $0x8] sm:$0xff]
    %v44 = vld [vmem:[#allocation2 + $0x10] sm:$0xff]
    %v45 = vld [vmem:[#allocation2 + $0x18] sm:$0xff]
    %vm46 = vcmask 261120
    %v48 = vsel %vm46, %v40, 0
    %v51 = vsel %vm46, %v41, 0
    %53 = vmatprep.subr.mxu0 0.0
    %54 = vmatpush1.msra.mxu0 %v42
    %55 = vmatprep.subr.mxu0 0.0
    %56 = vmatpush1.msra.mxu0 %v43
    %57 = vmatprep.subr.mxu0 0.0
    %58 = vmatpush1.msra.mxu0 %v44
    %59 = vmatprep.subr.mxu0 0.0
    %60 = vmatpush1.msra.mxu0 %v45
    %61 = vmatprep.subr.mxu0 0.0
    %62 = vmatpush1.msra.mxu0 0.0
    %63 = vmatprep.subr.mxu0 0.0
    %64 = vmatpush1.msra.mxu0 0.0
    %65 = vmatprep.subr.mxu0 0.0
    %66 = vmatpush1.msra.mxu0 0.0
    %67 = vmatprep.subr.mxu0 0.0
    %68 = vmatpush1.msra.mxu0 0.0
    %69 = vmatprep.subr.mxu0 0.0
    %70 = vmatpush1.msra.mxu0 0.0
    %71 = vmatprep.subr.mxu0 0.0
    %72 = vmatpush1.msra.mxu0 0.0
    %73 = vmatprep.subr.mxu0 0.0
    %74 = vmatpush1.msra.mxu0 0.0
    %75 = vmatprep.subr.mxu0 0.0
    %76 = vmatpush1.msra.mxu0 0.0
    %77 = vmatprep.subr.mxu0 0.0
    %78 = vmatpush1.msra.mxu0 0.0
    %79 = vmatprep.subr.mxu0 0.0
    %80 = vmatpush1.msra.mxu0 0.0
    %81 = vmatprep.subr.mxu0 0.0
    %82 = vmatpush1.msra.mxu0 0.0
    %83 = vmatprep.subr.mxu0 0.0
    %84 = vmatpush1.msra.mxu0 0.0
    %85 = vmatprep.subr.mxu0 0.0
    %86 = vmatpush1.msra.mxu0 0.0
    %87 = vmatprep.subr.mxu0 0.0
    %88 = vmatpush1.msra.mxu0 0.0
    %89 = vmatprep.subr.mxu0 0.0
    %90 = vmatpush1.msra.mxu0 0.0
    %91 = vmatprep.subr.mxu0 0.0
    %92 = vmatpush1.msra.mxu0 0.0
    %93 = vmatprep.subr.mxu0 0.0
    %94 = vmatpush1.msra.mxu0 0.0
    %95 = vmatprep.subr.mxu0 0.0
    %96 = vmatpush1.msra.mxu0 0.0
    %97 = vmatprep.subr.mxu0 0.0
    %98 = vmatpush1.msra.mxu0 0.0
    %99 = vmatprep.subr.mxu0 0.0
    %100 = vmatpush1.msra.mxu0 0.0
    %101 = vmatprep.subr.mxu0 0.0
    %102 = vmatpush1.msra.mxu0 0.0
    %103 = vmatprep.subr.mxu0 0.0
    %104 = vmatpush1.msra.mxu0 0.0
    %105 = vmatprep.subr.mxu0 0.0
    %106 = vmatpush1.msra.mxu0 0.0
    %107 = vmatprep.subr.mxu0 0.0
    %108 = vmatpush1.msra.mxu0 0.0
    %109 = vmatprep.subr.mxu0 0.0
    %110 = vmatpush1.msra.mxu0 0.0
    %111 = vmatprep.subr.mxu0 0.0
    %112 = vmatpush1.msra.mxu0 0.0
    %113 = vmatprep.subr.mxu0 0.0
    %114 = vmatpush1.msra.mxu0 0.0
    %115 = vmatprep.subr.mxu0 0.0
    %116 = vmatpush1.msra.mxu0 0.0
    %117 = vmatprep.mubr.f32.mxu0 0.0
    %118 = vmatmul.mubr.f32.gmra.mrb[0].mxu0 %v48
    %v119 = vpop.f32.mrb[0].mxu0
    %v120 = vadd.f32 0.0, %v119
    %v121 = vpop.f32.mrb[0].mxu0
    %122 = vmatprep.mubr.f32.mxu0 0.0
    %123 = vmatmul.mubr.f32.gmra.mrb[0].mxu0 %v51
    %v124 = vpop.f32.mrb[0].mxu0
    %v125 = vadd.f32 0.0, %v124
    %v126 = vpop.f32.mrb[0].mxu0
    %127 = vdwg.mxu0
    %128 = vst [vmem:[#allocation5] sm:$0xff] %v120
    %129 = vst [vmem:[#allocation5 + $0x8] sm:$0xff] %v125
    // Predicated region
    $region14: #{tpu_custom_call.1} parent=1 // pred_check
      _
    $region15: #{tpu_custom_call.1} parent=1 // pred_check_branch
      %131 = sbr.rel (0) target = $region17
    $region16: #{tpu_custom_call.1} parent=1 // pred_region
      %s133 = ssub.s32 256, 256
      %134 = vsyncadd [#allocation4], %s133
      %s135 = sshll.u32 [#allocation5], 4
      %s136 = int_to_ptr.vmem [resolvable:$true] %s135
      %141 = dma.vmem_to_hbm [thread:$0]  %s136, 256, %s2, [#allocation4], 128, 128, 8
    $region17: #{tpu_custom_call.1} parent=1 // pred_fallthru
      _
    // Predicated region
    $region18: #{tpu_custom_call.1} parent=1 // pred_check
      _
    $region19: #{tpu_custom_call.1} parent=1 // pred_check_branch
      %143 = sbr.rel (0) target = $region21
    $region20: #{tpu_custom_call.1} parent=1 // pred_region
      %144 = dma.done [#allocation4], 256
    $region21: #{tpu_custom_call.1} parent=1 // pred_fallthru
      _
    %145 = vsyncpa [#allocation3], 1
    %146 = vsyncpa [#allocation4], 1

</llo_original>
